<compile_context>
chip_gen: v6e
topology: v6e:2x2x1
jax: 0.10.0
libtpu: 0.0.40
codegen_flags: <defaults>
</compile_context>

<pallas_src>
import math
from functools import partial

import jax
import jax.numpy as jnp
from jax.experimental import pallas as pl
from jax.experimental.pallas import tpu as pltpu

EPS = 1e-15
N_PAD = 128       # padded node count (lane / sublane dim of the dense adjacency)
TE_MAX = 2048     # edge-tile size (amortizes per-grid-step overhead; ~MiB-scale tiles)


def _round_up(x, m):
    return ((x + m - 1) // m) * m


# ---------------------------------------------------------------------------
# Pallas kernels
# ---------------------------------------------------------------------------
def _fused_mask_kernel(row_ref, col_ref, val_ref, out_ref, s_ref):
    """Fused scatter / symmetrize / gather over a (phase, edge-tile) grid.

    row_ref/col_ref/val_ref: (1, TE) lane-major edge blocks.
    out_ref: (1, TE) f32, written only in phase 1 (index_map keeps it resident
             through phase 0 so no uninitialized write-backs occur).
    s_ref:   (N_PAD, N_PAD) f32 VMEM scratch — dense adjacency accumulator,
             persistent across the whole grid.
    """
    p = pl.program_id(0)
    k = pl.program_id(1)
    last_k = pl.num_programs(1) - 1

    sub_ids = jax.lax.broadcasted_iota(jnp.int32, (N_PAD, 1), 0)   # (128, 1)

    @pl.when(p == 0)
    def _scatter():
        @pl.when(k == 0)
        def _():
            s_ref[...] = jnp.zeros_like(s_ref)

        row_hit = row_ref[...] == sub_ids                              # (N_PAD, TE) bool
        Rv = jnp.where(row_hit, val_ref[...], 0.0)                     # (N_PAD, TE) f32
        Q = (col_ref[...] == sub_ids).astype(jnp.float32)              # (N_PAD, TE) f32
        # A[i, j] += sum_e val_e * [row_e == i] * [col_e == j]  (trans_b MXU contraction)
        s_ref[...] += jax.lax.dot_general(
            Rv, Q, (((1,), (1,)), ((), ())),
            preferred_element_type=jnp.float32)

        @pl.when(k == last_k)
        def _():
            A = s_ref[...]
            s_ref[...] = (A + A.T) * 0.5                               # symmetrize once

    @pl.when(p == 1)
    def _gather():
        C = (col_ref[...] == sub_ids).astype(jnp.float32)              # (N_PAD, TE)
        G = jnp.dot(s_ref[...], C, preferred_element_type=jnp.float32)  # G[n, e] = S[n, col_e]
        out_ref[...] = jnp.where(row_ref[...] == sub_ids, G, 0.0).sum(
            axis=0, keepdims=True)                                     # S[row_e, col_e]


def _feat_mask_kernel(x_ref, m_ref, o_ref):
    """h = x * sigmoid(node_feat_mask); per-tile sigmoid recompute is O(F) << O(TN*F)."""
    o_ref[...] = x_ref[...] * jax.nn.sigmoid(m_ref[...])


# ---------------------------------------------------------------------------
# Wrappers (traced under one jax.jit)
# ---------------------------------------------------------------------------
def _sym_edge_mask(row, col, val):
    """sym_edge_mask[e] = ((A + A.T)/2)[row[e], col[e]], A = dense scatter of val."""
    E = row.shape[0]
    E_pad = _round_up(max(E, 1), 128)
    if E_pad <= TE_MAX:
        TE = E_pad
        num_tiles = 1
    else:
        num_tiles = -(-E_pad // TE_MAX)
        TE = _round_up(-(-E_pad // num_tiles), 128)
        E_pad = TE * num_tiles
    pad = E_pad - E

    # Padded edges: row = col = 0 and val = 0 -> inert in the scatter; their
    # gathered values are sliced off below.
    row_p = jnp.pad(row.astype(jnp.int32), (0, pad)).reshape(1, E_pad)
    col_p = jnp.pad(col.astype(jnp.int32), (0, pad)).reshape(1, E_pad)
    val_p = jnp.pad(val.astype(jnp.float32), (0, pad)).reshape(1, E_pad)

    out = pl.pallas_call(
        _fused_mask_kernel,
        out_shape=jax.ShapeDtypeStruct((1, E_pad), jnp.float32),
        grid=(2, num_tiles),
        in_specs=[
            pl.BlockSpec((1, TE), lambda p, k: (0, k)),
            pl.BlockSpec((1, TE), lambda p, k: (0, k)),
            pl.BlockSpec((1, TE), lambda p, k: (0, k)),
        ],
        # Resident at (0, 0) through phase 0, then one flush per tile in phase 1.
        out_specs=pl.BlockSpec((1, TE), lambda p, k: (0, p * k)),
        scratch_shapes=[pltpu.VMEM((N_PAD, N_PAD), jnp.float32)],
        compiler_params=pltpu.CompilerParams(
            dimension_semantics=("arbitrary", "arbitrary")),
    )(row_p, col_p, val_p)

    return out[0, :E]


def _masked_features(x, node_feat_mask):
    N, F = x.shape
    x_f = x.astype(jnp.float32)
    m2 = node_feat_mask.astype(jnp.float32).reshape(1, F)

    # Full-extent last dim (F) is exempt from the (8,128) constraint; no pad/slice
    # HBM passes around this purely memory-bound kernel.
    TN = N if N <= 1024 else 512
    grid = (pl.cdiv(N, TN),)

    out = pl.pallas_call(
        _feat_mask_kernel,
        out_shape=jax.ShapeDtypeStruct((N, F), jnp.float32),
        grid=grid,
        in_specs=[
            pl.BlockSpec((TN, F), lambda i: (i, 0)),
            pl.BlockSpec((1, F), lambda i: (0, 0)),
        ],
        out_specs=pl.BlockSpec((TN, F), lambda i: (i, 0)),
        compiler_params=pltpu.CompilerParams(dimension_semantics=("parallel",)),
    )(x_f, m2)
    return out


@partial(jax.jit, static_argnames=("mask_features",))
def _forward_impl(x, row, col, edge_mask, node_feat_mask, mask_features):
    sym_edge_mask = _sym_edge_mask(row, col, edge_mask)
    h = _masked_features(x, node_feat_mask) if mask_features else x
    return sym_edge_mask, h


# ---------------------------------------------------------------------------
# Module port
# ---------------------------------------------------------------------------
class GNNExplainerPallas:
    """JAX/Pallas port of GNNExplainer.forward mask-tensor semantics.

    __set_masks__ : node_feat_mask = 0.1 * randn(F)
                    edge_mask      = gain('relu') * sqrt(2 / (2N)) * randn(E)
    forward       : returns sym_edge_mask of the (raw) edge_mask, i.e. the value
                    gnn_explainer_alg returns after symmetrizing the dense adjacency;
                    when mask_features, also computes h = x * sigmoid(node_feat_mask).
    """
    coeffs = {'edge_size': 0.005, 'node_feat_size': 1.0,
              'edge_ent': 1.0, 'node_feat_ent': 0.1}

    def __init__(self, num_nodes, num_feats, num_edges, seed=0):
        self.num_nodes = num_nodes
        self.num_feats = num_feats
        self.num_edges = num_edges
        key = jax.random.PRNGKey(seed)
        k_nf, k_em = jax.random.split(key)
        self.node_feat_mask = 0.1 * jax.random.normal(k_nf, (num_feats,), jnp.float32)
        relu_gain = math.sqrt(2.0)  # torch.nn.init.calculate_gain('relu')
        std = relu_gain * math.sqrt(2.0 / (2.0 * num_nodes))
        self.edge_mask = std * jax.random.normal(k_em, (num_edges,), jnp.float32)
        self.masked_x = None

    def forward(self, x, edge_index, mask_features=False, **kwargs):
        # TODO(synk): the Adam training loop over the external GNN model (CrossEntropy +
        # entropy/size regularizers + loss_oodgat + backward) has no in-kernel equivalent
        # without the model; only the mask-tensor math of the forward path is ported.
        # TODO(synk): graphs with num_nodes > 128 need node-dimension tiling of the dense A
        # (use 256x256 output blocks on v6e/v7x to fill the 2x256 MXU).
        assert self.num_nodes <= N_PAD
        row, col = edge_index[0], edge_index[1]
        sym_edge_mask, h = _forward_impl(x, row, col, self.edge_mask,
                                         self.node_feat_mask, mask_features)
        self.masked_x = h  # h feeds the GNN model in the torch path; kept (not dead compute)
        return sym_edge_mask


# ---------------------------------------------------------------------------
# Main
# ---------------------------------------------------------------------------
if __name__ == "__main__":
    N, F, E = 64, 32, 96
    key = jax.random.PRNGKey(0)
    k_x, k_r, k_c = jax.random.split(key, 3)
    x = jax.random.normal(k_x, (N, F), jnp.float32)
    row = jax.random.randint(k_r, (E,), 0, N, dtype=jnp.int32)
    col = jax.random.randint(k_c, (E,), 0, N, dtype=jnp.int32)
    edge_index = jnp.stack([row, col], axis=0)

    explainer = GNNExplainerPallas(num_nodes=N, num_feats=F, num_edges=E, seed=0)
    out = explainer.forward(x, edge_index, mask_features=True)
    out = jax.block_until_ready(out)
    h = jax.block_until_ready(explainer.masked_x)

    # Pure-JAX reference for the scatter / symmetrize / gather hot path.
    A_ref = jnp.zeros((N, N), jnp.float32).at[row, col].add(explainer.edge_mask)
    S_ref = (A_ref + A_ref.T) * 0.5
    ref = S_ref[row, col]
    h_ref = x * jax.nn.sigmoid(explainer.node_feat_mask)[None, :]

    assert out.shape == (E,)
    assert jnp.allclose(out, ref, atol=1e-5, rtol=1e-5), "sym_edge_mask mismatch vs reference"
    assert h.shape == (N, F)
    assert jnp.allclose(h, h_ref, atol=1e-5, rtol=1e-5), "masked features mismatch vs reference"

    print("KERNEL_OK")
</pallas_src>

<mosaic_0001>
module attributes {stable_mosaic.version = 11 : i64} {
  func.func @_fused_mask_kernel(%arg0: i32, %arg1: i32, %arg2: memref<1x128xi32, #tpu.memory_space<vmem>>, %arg3: memref<1x128xi32, #tpu.memory_space<vmem>>, %arg4: memref<1x128xf32, #tpu.memory_space<vmem>>, %arg5: memref<1x128xf32, #tpu.memory_space<vmem>>, %arg6: memref<128x128xf32, #tpu.memory_space<vmem>>) attributes {dimension_semantics = [#tpu.dimension_semantics<arbitrary>, #tpu.dimension_semantics<arbitrary>], iteration_bounds = array<i64: 2, 1>, scalar_prefetch = 0 : i64, scratch_operands = 1 : i64, tpu.core_type = #tpu.core_type<tc>, window_params = [{transform_indices = @transform_0, window_bounds = array<i64: 1, 128>}, {transform_indices = @transform_1, window_bounds = array<i64: 1, 128>}, {transform_indices = @transform_2, window_bounds = array<i64: 1, 128>}, {transform_indices = @transform_3, window_bounds = array<i64: 1, 128>}]} {
    %0 = tpu.iota {dimensions = array<i32: 0>} : vector<128x1xi32>
    %c0_i32 = arith.constant 0 : i32
    %1 = arith.cmpi eq, %arg0, %c0_i32 : i32
    %2 = arith.extui %1 : i1 to i32
    %c0_i32_0 = arith.constant 0 : i32
    %3 = arith.cmpi ne, %2, %c0_i32_0 : i32
    scf.if %3 {
      %c0_i32_2 = arith.constant 0 : i32
      %7 = arith.cmpi eq, %arg1, %c0_i32_2 : i32
      %8 = arith.extui %7 : i1 to i32
      %c0_i32_3 = arith.constant 0 : i32
      %9 = arith.cmpi ne, %8, %c0_i32_3 : i32
      scf.if %9 {
        %cst_16 = arith.constant 0.000000e+00 : f32
        %32 = vector.broadcast %cst_16 : f32 to vector<128x128xf32>
        %c0_17 = arith.constant 0 : index
        %c0_18 = arith.constant 0 : index
        %33 = vector.load %arg6[%c0_17, %c0_18] : memref<128x128xf32, #tpu.memory_space<vmem>>, vector<128x128xf32>
        tpu.vector_store %arg6[%c0_17, %c0_18], %32 {strides = array<i32>} : memref<128x128xf32, #tpu.memory_space<vmem>>, vector<128x128xf32>,
      } else {
      }
      %c0 = arith.constant 0 : index
      %c0_4 = arith.constant 0 : index
      %10 = vector.load %arg2[%c0, %c0_4] : memref<1x128xi32, #tpu.memory_space<vmem>>, vector<1x128xi32>
      %11 = vector.broadcast %10 : vector<1x128xi32> to vector<128x128xi32>
      %12 = vector.broadcast %0 : vector<128x1xi32> to vector<128x128xi32>
      %13 = arith.cmpi eq, %11, %12 : vector<128x128xi32>
      %c0_5 = arith.constant 0 : index
      %c0_6 = arith.constant 0 : index
      %14 = vector.load %arg4[%c0_5, %c0_6] : memref<1x128xf32, #tpu.memory_space<vmem>>, vector<1x128xf32>
      %cst = arith.constant 0.000000e+00 : f32
      %15 = vector.shape_cast %14 : vector<1x128xf32> to vector<1x128xf32>
      %16 = vector.broadcast %15 : vector<1x128xf32> to vector<128x128xf32>
      %17 = vector.broadcast %cst : f32 to vector<128x128xf32>
      %18 = arith.select %13, %16, %17 : vector<128x128xi1>, vector<128x128xf32>
      %c0_7 = arith.constant 0 : index
      %c0_8 = arith.constant 0 : index
      %19 = vector.load %arg3[%c0_7, %c0_8] : memref<1x128xi32, #tpu.memory_space<vmem>>, vector<1x128xi32>
      %20 = vector.broadcast %19 : vector<1x128xi32> to vector<128x128xi32>
      %21 = vector.broadcast %0 : vector<128x1xi32> to vector<128x128xi32>
      %22 = arith.cmpi eq, %20, %21 : vector<128x128xi32>
      %23 = arith.extui %22 : vector<128x128xi1> to vector<128x128xi32>
      %24 = arith.sitofp %23 : vector<128x128xi32> to vector<128x128xf32>
      %c0_9 = arith.constant 0 : index
      %c0_10 = arith.constant 0 : index
      %25 = vector.load %arg6[%c0_9, %c0_10] : memref<128x128xf32, #tpu.memory_space<vmem>>, vector<128x128xf32>
      %cst_11 = arith.constant dense<0.000000e+00> : vector<128x128xf32>
      %26 = tpu.matmul %18, %24, %cst_11 {dimension_numbers = #tpu.dot_dimension_numbers<[1], [1], [0], [0], [0, 0, 1, 0], [], []>} : vector<128x128xf32>, vector<128x128xf32>, vector<128x128xf32> -> vector<128x128xf32>
      %27 = arith.addf %25, %26 : vector<128x128xf32>
      %c0_12 = arith.constant 0 : index
      %c0_13 = arith.constant 0 : index
      %28 = vector.load %arg6[%c0_12, %c0_13] : memref<128x128xf32, #tpu.memory_space<vmem>>, vector<128x128xf32>
      tpu.vector_store %arg6[%c0_12, %c0_13], %27 {strides = array<i32>} : memref<128x128xf32, #tpu.memory_space<vmem>>, vector<128x128xf32>,
      %c0_i32_14 = arith.constant 0 : i32
      %29 = arith.cmpi eq, %arg1, %c0_i32_14 : i32
      %30 = arith.extui %29 : i1 to i32
      %c0_i32_15 = arith.constant 0 : i32
      %31 = arith.cmpi ne, %30, %c0_i32_15 : i32
      scf.if %31 {
        %c0_16 = arith.constant 0 : index
        %c0_17 = arith.constant 0 : index
        %32 = vector.load %arg6[%c0_16, %c0_17] : memref<128x128xf32, #tpu.memory_space<vmem>>, vector<128x128xf32>
        %33 = tpu.transpose %32, [1, 0] : vector<128x128xf32> -> vector<128x128xf32>
        %34 = arith.addf %32, %33 : vector<128x128xf32>
        %cst_18 = arith.constant 5.000000e-01 : f32
        %35 = vector.broadcast %cst_18 : f32 to vector<128x128xf32>
        %36 = arith.mulf %34, %35 : vector<128x128xf32>
        %c0_19 = arith.constant 0 : index
        %c0_20 = arith.constant 0 : index
        %37 = vector.load %arg6[%c0_19, %c0_20] : memref<128x128xf32, #tpu.memory_space<vmem>>, vector<128x128xf32>
        tpu.vector_store %arg6[%c0_19, %c0_20], %36 {strides = array<i32>} : memref<128x128xf32, #tpu.memory_space<vmem>>, vector<128x128xf32>,
      } else {
      }
    } else {
    }
    %c1_i32 = arith.constant 1 : i32
    %4 = arith.cmpi eq, %arg0, %c1_i32 : i32
    %5 = arith.extui %4 : i1 to i32
    %c0_i32_1 = arith.constant 0 : i32
    %6 = arith.cmpi ne, %5, %c0_i32_1 : i32
    scf.if %6 {
      %c0 = arith.constant 0 : index
      %c0_2 = arith.constant 0 : index
      %7 = vector.load %arg3[%c0, %c0_2] : memref<1x128xi32, #tpu.memory_space<vmem>>, vector<1x128xi32>
      %8 = vector.broadcast %7 : vector<1x128xi32> to vector<128x128xi32>
      %9 = vector.broadcast %0 : vector<128x1xi32> to vector<128x128xi32>
      %10 = arith.cmpi eq, %8, %9 : vector<128x128xi32>
      %11 = arith.extui %10 : vector<128x128xi1> to vector<128x128xi32>
      %12 = arith.sitofp %11 : vector<128x128xi32> to vector<128x128xf32>
      %c0_3 = arith.constant 0 : index
      %c0_4 = arith.constant 0 : index
      %13 = vector.load %arg6[%c0_3, %c0_4] : memref<128x128xf32, #tpu.memory_space<vmem>>, vector<128x128xf32>
      %cst = arith.constant dense<0.000000e+00> : vector<128x128xf32>
      %14 = tpu.matmul %13, %12, %cst {dimension_numbers = #tpu.dot_dimension_numbers<[1], [0], [0], [1], [0, 0, 1, 1], [], []>} : vector<128x128xf32>, vector<128x128xf32>, vector<128x128xf32> -> vector<128x128xf32>
      %c0_5 = arith.constant 0 : index
      %c0_6 = arith.constant 0 : index
      %15 = vector.load %arg2[%c0_5, %c0_6] : memref<1x128xi32, #tpu.memory_space<vmem>>, vector<1x128xi32>
      %16 = vector.broadcast %15 : vector<1x128xi32> to vector<128x128xi32>
      %17 = vector.broadcast %0 : vector<128x1xi32> to vector<128x128xi32>
      %18 = arith.cmpi eq, %16, %17 : vector<128x128xi32>
      %cst_7 = arith.constant 0.000000e+00 : f32
      %19 = vector.broadcast %cst_7 : f32 to vector<128x128xf32>
      %20 = arith.select %18, %14, %19 : vector<128x128xi1>, vector<128x128xf32>
      %cst_8 = arith.constant dense<0.000000e+00> : vector<128xf32>
      %21 = vector.multi_reduction <add>, %20, %cst_8 [0] : vector<128x128xf32> to vector<128xf32>
      %22 = vector.shape_cast %21 : vector<128xf32> to vector<1x128xf32>
      %c0_9 = arith.constant 0 : index
      %c0_10 = arith.constant 0 : index
      %23 = vector.load %arg5[%c0_9, %c0_10] : memref<1x128xf32, #tpu.memory_space<vmem>>, vector<1x128xf32>
      tpu.vector_store %arg5[%c0_9, %c0_10], %22 {strides = array<i32>} : memref<1x128xf32, #tpu.memory_space<vmem>>, vector<1x128xf32>,
    } else {
    }
    return
  }
  func.func @transform_0(%arg0: i32, %arg1: i32) -> (i32, i32) {
    %c0_i32 = arith.constant 0 : i32
    %c0_i32_0 = arith.constant 0 : i32
    return %c0_i32, %arg1 : i32, i32
  }
  func.func @transform_1(%arg0: i32, %arg1: i32) -> (i32, i32) {
    %c0_i32 = arith.constant 0 : i32
    %c0_i32_0 = arith.constant 0 : i32
    return %c0_i32, %arg1 : i32, i32
  }
  func.func @transform_2(%arg0: i32, %arg1: i32) -> (i32, i32) {
    %c0_i32 = arith.constant 0 : i32
    %c0_i32_0 = arith.constant 0 : i32
    return %c0_i32, %arg1 : i32, i32
  }
  func.func @transform_3(%arg0: i32, %arg1: i32) -> (i32, i32) {
    %0 = arith.muli %arg0, %arg1 : i32
    %c0_i32 = arith.constant 0 : i32
    %c0_i32_0 = arith.constant 0 : i32
    return %c0_i32, %0 : i32, i32
  }
}

module attributes {stable_mosaic.version = 11 : i64} {
  func.func @_feat_mask_kernel(%arg0: i32, %arg1: memref<64x32xf32, #tpu.memory_space<vmem>>, %arg2: memref<1x32xf32, #tpu.memory_space<vmem>>, %arg3: memref<64x32xf32, #tpu.memory_space<vmem>>) attributes {dimension_semantics = [#tpu.dimension_semantics<parallel>], iteration_bounds = array<i64: 1>, scalar_prefetch = 0 : i64, scratch_operands = 0 : i64, tpu.core_type = #tpu.core_type<tc>, window_params = [{transform_indices = @transform_0, window_bounds = array<i64: 64, 32>}, {pipeline_mode = #tpu.pipeline_mode<synchronous>, transform_indices = @transform_1, window_bounds = array<i64: 1, 32>}, {transform_indices = @transform_2, window_bounds = array<i64: 64, 32>}]} {
    %c0 = arith.constant 0 : index
    %c0_0 = arith.constant 0 : index
    %0 = vector.load %arg1[%c0, %c0_0] : memref<64x32xf32, #tpu.memory_space<vmem>>, vector<64x32xf32>
    %c0_1 = arith.constant 0 : index
    %c0_2 = arith.constant 0 : index
    %1 = vector.load %arg2[%c0_1, %c0_2] : memref<1x32xf32, #tpu.memory_space<vmem>>, vector<1x32xf32>
    %2 = arith.negf %1 : vector<1x32xf32>
    %3 = math.exp %2 : vector<1x32xf32>
    %cst = arith.constant 1.000000e+00 : f32
    %4 = vector.broadcast %cst : f32 to vector<1x32xf32>
    %5 = arith.addf %4, %3 : vector<1x32xf32>
    %6 = arith.divf %4, %5 : vector<1x32xf32>
    %7 = vector.broadcast %6 : vector<1x32xf32> to vector<64x32xf32>
    %8 = arith.mulf %0, %7 : vector<64x32xf32>
    %c0_3 = arith.constant 0 : index
    %c0_4 = arith.constant 0 : index
    %9 = vector.load %arg3[%c0_3, %c0_4] : memref<64x32xf32, #tpu.memory_space<vmem>>, vector<64x32xf32>
    tpu.vector_store %arg3[%c0_3, %c0_4], %8 {strides = array<i32>} : memref<64x32xf32, #tpu.memory_space<vmem>>, vector<64x32xf32>,
    return
  }
  func.func @transform_0(%arg0: i32) -> (i32, i32) {
    %c0_i32 = arith.constant 0 : i32
    %c0_i32_0 = arith.constant 0 : i32
    return %arg0, %c0_i32 : i32, i32
  }
  func.func @transform_1(%arg0: i32) -> (i32, i32) {
    %c0_i32 = arith.constant 0 : i32
    %c0_i32_0 = arith.constant 0 : i32
    %c0_i32_1 = arith.constant 0 : i32
    return %c0_i32, %c0_i32_0 : i32, i32
  }
  func.func @transform_2(%arg0: i32) -> (i32, i32) {
    %c0_i32 = arith.constant 0 : i32
    %c0_i32_0 = arith.constant 0 : i32
    return %arg0, %c0_i32 : i32, i32
  }
}

</mosaic_0001>

<llo_original>
// kernel: _forward_impl.3
$region0: #{_forward_impl.3}
  #allocation0 [shape = 'u32[]', space=smem, size = 0x4, offset = 0x4, fixed_abs, tag = 'smem constant byte address 0x4 - core index']
  #allocation1 [shape = 'u32[144,128]{1,0:T(1,128)}', space=vmem, size = 0x12000, scoped, tag = 'internal scratch']
  %s0 = inlined_call_operand.vmem [shape: f32[64,32], index: 0, kind: input, shape index: {}]
  %s1 = inlined_call_operand.vmem [shape: f32[1,32], index: 1, kind: input, shape index: {}]
  %s2 = inlined_call_operand.vmem [shape: f32[64,32], index: 2, kind: output, shape index: {}]
  %s3 = sld [smem:[#allocation0]]
  $region18: #{_forward_impl.3} parent=0
    _
  %s5 = ssub.s32 1, %s3
  %s6 = scalar_select 0, %s5, %s3
  // Predicated region
  $region2: #{_forward_impl.3} parent=0 // pred_check
    _
  $region3: #{_forward_impl.3} parent=0 // pred_check_branch
    %8 = sbr.rel (0) target = $region5
  $region4: #{_forward_impl.3} parent=0 // pred_region
    _
  $region5: #{_forward_impl.3} parent=0 // pred_fallthru
    _
  // Predicated region
  $region6: #{_forward_impl.3} parent=0 // pred_check
    _
  $region7: #{_forward_impl.3} parent=0 // pred_check_branch
    %10 = sbr.rel (0) target = $region9
  $region8: #{_forward_impl.3} parent=0 // pred_region
    _
  $region9: #{_forward_impl.3} parent=0 // pred_fallthru
    _
  %v11 = vld [vmem:[%s0] sm:$0xff]
  %v12 = vld [vmem:[%s0 + $0x8] sm:$0xff]
  %v13 = vld [vmem:[%s0 + $0x10] sm:$0xff]
  %v14 = vld [vmem:[%s0 + $0x18] sm:$0xff]
  %v15 = vld [vmem:[%s0 + $0x20] sm:$0xff]
  %v16 = vld [vmem:[%s0 + $0x28] sm:$0xff]
  %v17 = vld [vmem:[%s0 + $0x30] sm:$0xff]
  %v18 = vld [vmem:[%s0 + $0x38] sm:$0xff]
  %v19 = vld [vmem:[%s1] sm:$0x1]
  %v20 = vxor.u32 %v19, 2147483648
  %v21 = vmul.f32 %v20, 1.442695
  %v22 = vpow.pop %v21
  %v23 = vadd.f32 %v22, 1.0
  %v24 = vrcp.pop %v23
  %v25 = vmul.f32 1.0, %v24
  %v27 = vlaneseq
  %v28 = vshrl.u32 %v27, 7
  %v29 = vsub.s32 0, %v28
  %v30 = vrot.slane %v25, %v29
  %v32 = vmul.f32 %v11, %v30
  %v33 = vmul.f32 %v12, %v30
  %v34 = vmul.f32 %v13, %v30
  %v35 = vmul.f32 %v14, %v30
  %v36 = vmul.f32 %v15, %v30
  %v37 = vmul.f32 %v16, %v30
  %v38 = vmul.f32 %v17, %v30
  %v39 = vmul.f32 %v18, %v30
  %vm40 = vcmask 261120
  %41 = vst.msk [vmem:[%s2] sm:$0xff] %vm40, %v32
  %42 = vst.msk [vmem:[%s2 + $0x8] sm:$0xff] %vm40, %v33
  %43 = vst.msk [vmem:[%s2 + $0x10] sm:$0xff] %vm40, %v34
  %44 = vst.msk [vmem:[%s2 + $0x18] sm:$0xff] %vm40, %v35
  %45 = vst.msk [vmem:[%s2 + $0x20] sm:$0xff] %vm40, %v36
  %46 = vst.msk [vmem:[%s2 + $0x28] sm:$0xff] %vm40, %v37
  %47 = vst.msk [vmem:[%s2 + $0x30] sm:$0xff] %vm40, %v38
  %48 = vst.msk [vmem:[%s2 + $0x38] sm:$0xff] %vm40, %v39
  // Predicated region
  $region10: #{_forward_impl.3} parent=0 // pred_check
    _
  $region11: #{_forward_impl.3} parent=0 // pred_check_branch
    %50 = sbr.rel (0) target = $region13
  $region12: #{_forward_impl.3} parent=0 // pred_region
    _
  $region13: #{_forward_impl.3} parent=0 // pred_fallthru
    _
  // Predicated region
  $region14: #{_forward_impl.3} parent=0 // pred_check
    _
  $region15: #{_forward_impl.3} parent=0 // pred_check_branch
    %52 = sbr.rel (0) target = $region17
  $region16: #{_forward_impl.3} parent=0 // pred_region
    _
  $region17: #{_forward_impl.3} parent=0 // pred_fallthru
    _

// kernel: _forward_impl.2
$region0: #{_forward_impl.2}
  #allocation0 [shape = 'u32[]', space=smem, size = 0x4, offset = 0x4, fixed_abs, tag = 'smem constant byte address 0x4 - core index']
  #allocation1 [shape = 'u32[144,128]{1,0:T(1,128)}', space=vmem, size = 0x12000, scoped, tag = 'internal scratch']
  #allocation2 [shape = 'f32[128,128]{1,0:T(8,128)}', space=vmem, size = 0x10000, scoped, tag = 'scratch operand']
  %s0 = inlined_call_operand.vmem [shape: s32[1,128], index: 0, kind: input, shape index: {}]
  %s1 = inlined_call_operand.vmem [shape: s32[1,128], index: 1, kind: input, shape index: {}]
  %s2 = inlined_call_operand.vmem [shape: f32[1,128], index: 2, kind: input, shape index: {}]
  %s3 = inlined_call_operand.vmem [shape: f32[1,128], index: 3, kind: output, shape index: {}]
  %s4 = sld [smem:[#allocation0]]
  $region61: #{_forward_impl.2} parent=0
    _
  %s6 = ssub.s32 1, %s4
  %s7 = scalar_select 0, %s6, %s4
  loop: start=0, step=1, limit=4
  $region2: #{_forward_impl.2} parent=0 // loop_pre_header
    _
  $region3: #{_forward_impl.2} parent=0 // loop_header
    %s9 = sphi 0, %s13
    %p10 = scmp.ge.s32.totalorder %s9, 4
    %s16 = sphi 0, %s28
    %s17 = sphi 0, %s24
    %s18 = sphi 0, %s16
    %s19 = sphi 0, %s17
    %s20 = sphi 0, %s18
    %s21 = sphi 0, %s19
    %s31 = sphi 0, %s33
    %s34 = sphi 0, %s31
    %s35 = sphi 0, %s34
    %s51 = sphi 0, %s35
    %s57 = sphi 0, %s59
    %s60 = sphi 0, %s57
    %s61 = sphi 0, %s60
    %s77 = sphi 0, %s61
    %s83 = sphi 0, %s85
    %s86 = sphi 0, %s83
    %s87 = sphi 0, %s86
    %s103 = sphi 0, %s87
    %s111 = sphi 0, %s113
    %s114 = sphi 0, %s111
    %s115 = sphi 0, %s114
    %s131 = sphi 0, %s115
  $region4: #{_forward_impl.2} parent=0 // loop_header_branch
    %12 = sbr.rel (%p10) target = $region8
  $region5: #{_forward_impl.2} parent=0 // loop_body
    %s14 = ssub.s32 %s9, 1
    %s15 = ssub.s32 %s9, 2
    %s22 = sadd.s32 1, %s17
    %p23 = scmp.ge.s32.totalorder %s22, 1
    %s24 = scalar_select %p23, 0, %s22
    %s25 = sadd.s32 1, %s16
    %s26 = scalar_select %p23, %s25, %s16
    %p27 = scmp.ge.s32.totalorder %s26, 2
    %s28 = scalar_select %p27, 0, %s26
    %s29 = ssub.s32 %s17, %s24
    %p30 = scmp.eq.s32.totalorder %s29, 0
    %s32 = sadd.s32 %s31, 1
    %s33 = scalar_select %p30, %s31, %s32
    %p36 = pneg %p30
    %p37 = scmp.eq.s32.totalorder %s9, 1
    %p38 = por %p36, %p37
    %p39 = scmp.ne.s32.totalorder %s31, %s34
    %p40 = scmp.eq.s32.totalorder %s9, 0
    %p41 = por %p39, %p40
    %p42 = scmp.ne.s32.totalorder %s31, %s34
    %p43 = scmp.eq.s32.totalorder %s14, 1
    %p44 = por %p42, %p43
    %p45 = scmp.ne.s32.totalorder %s34, %s35
    %p46 = scmp.eq.s32.totalorder %s14, 0
    %p47 = por %p45, %p46
    %p48 = scmp.ne.s32.totalorder %s34, %s35
    %p49 = scmp.eq.s32.totalorder %s15, 1
    %p50 = por %p48, %p49
    %p52 = scmp.ne.s32.totalorder %s35, %s51
    %p53 = scmp.eq.s32.totalorder %s15, 0
    %p54 = por %p52, %p53
    %s55 = ssub.s32 %s17, %s24
    %p56 = scmp.eq.s32.totalorder %s55, 0
    %s58 = sadd.s32 %s57, 1
    %s59 = scalar_select %p56, %s57, %s58
    %p62 = pneg %p56
    %p63 = scmp.eq.s32.totalorder %s9, 1
    %p64 = por %p62, %p63
    %p65 = scmp.ne.s32.totalorder %s57, %s60
    %p66 = scmp.eq.s32.totalorder %s9, 0
    %p67 = por %p65, %p66
    %p68 = scmp.ne.s32.totalorder %s57, %s60
    %p69 = scmp.eq.s32.totalorder %s14, 1
    %p70 = por %p68, %p69
    %p71 = scmp.ne.s32.totalorder %s60, %s61
    %p72 = scmp.eq.s32.totalorder %s14, 0
    %p73 = por %p71, %p72
    %p74 = scmp.ne.s32.totalorder %s60, %s61
    %p75 = scmp.eq.s32.totalorder %s15, 1
    %p76 = por %p74, %p75
    %p78 = scmp.ne.s32.totalorder %s61, %s77
    %p79 = scmp.eq.s32.totalorder %s15, 0
    %p80 = por %p78, %p79
    %s81 = ssub.s32 %s17, %s24
    %p82 = scmp.eq.s32.totalorder %s81, 0
    %s84 = sadd.s32 %s83, 1
    %s85 = scalar_select %p82, %s83, %s84
    %p88 = pneg %p82
    %p89 = scmp.eq.s32.totalorder %s9, 1
    %p90 = por %p88, %p89
    %p91 = scmp.ne.s32.totalorder %s83, %s86
    %p92 = scmp.eq.s32.totalorder %s9, 0
    %p93 = por %p91, %p92
    %p94 = scmp.ne.s32.totalorder %s83, %s86
    %p95 = scmp.eq.s32.totalorder %s14, 1
    %p96 = por %p94, %p95
    %p97 = scmp.ne.s32.totalorder %s86, %s87
    %p98 = scmp.eq.s32.totalorder %s14, 0
    %p99 = por %p97, %p98
    %p100 = scmp.ne.s32.totalorder %s86, %s87
    %p101 = scmp.eq.s32.totalorder %s15, 1
    %p102 = por %p100, %p101
    %p104 = scmp.ne.s32.totalorder %s87, %s103
    %p105 = scmp.eq.s32.totalorder %s15, 0
    %p106 = por %p104, %p105
    %s107 = smul.u32 %s16, %s17
    %s108 = smul.u32 %s28, %s24
    %s109 = ssub.s32 %s107, %s108
    %p110 = scmp.eq.s32.totalorder %s109, 0
    %s112 = sadd.s32 %s111, 1
    %s113 = scalar_select %p110, %s111, %s112
    %p116 = pneg %p110
    %p117 = scmp.eq.s32.totalorder %s9, 1
    %p118 = por %p116, %p117
    %p119 = scmp.ne.s32.totalorder %s111, %s114
    %p120 = scmp.eq.s32.totalorder %s9, 0
    %p121 = por %p119, %p120
    %p122 = scmp.ne.s32.totalorder %s111, %s114
    %p123 = scmp.eq.s32.totalorder %s14, 1
    %p124 = por %p122, %p123
    %p125 = scmp.ne.s32.totalorder %s114, %s115
    %p126 = scmp.eq.s32.totalorder %s14, 0
    %p127 = por %p125, %p126
    %p128 = scmp.ne.s32.totalorder %s114, %s115
    %p129 = scmp.eq.s32.totalorder %s15, 1
    %p130 = por %p128, %p129
    %p132 = scmp.ne.s32.totalorder %s115, %s131
    %p133 = scmp.eq.s32.totalorder %s15, 0
    %p134 = por %p132, %p133
    %p135 = scmp.le.s32.totalorder 1, %s9
    %p136 = scmp.lt.s32.totalorder %s9, 3
    %p137 = pnand %p135, %p136
    %p138 = pneg %p137
    // Predicated region
    $region9: #{_forward_impl.2} parent=5 // pred_check
      _
    $region10: #{_forward_impl.2} parent=5 // pred_check_branch
      %140 = sbr.rel (%p137) target = $region12
    $region11: #{_forward_impl.2} parent=5 // pred_region
      %s141 = ssub.s32 %s9, 1
      // Predicated region
      $region13: #{_forward_impl.2} parent=11 // pred_check
        %p142 = pneg %p47
      $region14: #{_forward_impl.2} parent=11 // pred_check_branch
        %144 = sbr.rel (%p142) target = $region16
      $region15: #{_forward_impl.2} parent=11 // pred_region
        %p145 = scmp.lt.s32.totalorder %s19, 0
        %s146 = scalar_select %p145, %s19, 0
        %s147 = scalar_lea.vmem %s0, %s146
      $region16: #{_forward_impl.2} parent=11 // pred_fallthru
        _
      // Predicated region
      $region17: #{_forward_impl.2} parent=11 // pred_check
        %p148 = pneg %p73
      $region18: #{_forward_impl.2} parent=11 // pred_check_branch
        %150 = sbr.rel (%p148) target = $region20
      $region19: #{_forward_impl.2} parent=11 // pred_region
        %p151 = scmp.lt.s32.totalorder %s19, 0
        %s152 = scalar_select %p151, %s19, 0
        %s153 = scalar_lea.vmem %s1, %s152
      $region20: #{_forward_impl.2} parent=11 // pred_fallthru
        _
      // Predicated region
      $region21: #{_forward_impl.2} parent=11 // pred_check
        %p154 = pneg %p99
      $region22: #{_forward_impl.2} parent=11 // pred_check_branch
        %156 = sbr.rel (%p154) target = $region24
      $region23: #{_forward_impl.2} parent=11 // pred_region
        %p157 = scmp.lt.s32.totalorder %s19, 0
        %s158 = scalar_select %p157, %s19, 0
        %s159 = scalar_lea.vmem %s2, %s158
      $region24: #{_forward_impl.2} parent=11 // pred_fallthru
        _
    $region12: #{_forward_impl.2} parent=5 // pred_fallthru
      _
    %p160 = scmp.lt.s32.totalorder %s9, 2
    // Predicated region
    $region25: #{_forward_impl.2} parent=5 // pred_check
      %p161 = pneg %p160
    $region26: #{_forward_impl.2} parent=5 // pred_check_branch
      %163 = sbr.rel (%p161) target = $region28
    $region27: #{_forward_impl.2} parent=5 // pred_region
      _
    $region28: #{_forward_impl.2} parent=5 // pred_fallthru
      _
    %p164 = scmp.le.s32.totalorder 1, %s9
    %p165 = scmp.lt.s32.totalorder %s9, 3
    %p166 = pnand %p164, %p165
    %p167 = pneg %p166
    // Predicated region
    $region29: #{_forward_impl.2} parent=5 // pred_check
      _
    $region30: #{_forward_impl.2} parent=5 // pred_check_branch
      %169 = sbr.rel (%p166) target = $region32
    $region31: #{_forward_impl.2} parent=5 // pred_region
      %s170 = ssub.s32 %s9, 1
      %p171 = scmp.lt.s32.totalorder %s19, 0
      %s172 = scalar_select %p171, %s19, 0
      %s173 = scalar_lea.vmem %s0, %s172
      %p174 = pneg %p47
      %p175 = pneg %p44
      %p176 = scmp.lt.s32.totalorder %s19, 0
      %s177 = scalar_select %p176, %s19, 0
      %s178 = scalar_lea.vmem %s1, %s177
      %p179 = pneg %p73
      %p180 = pneg %p70
      %p181 = scmp.lt.s32.totalorder %s19, 0
      %s182 = scalar_select %p181, %s19, 0
      %s183 = scalar_lea.vmem %s2, %s182
      %p184 = pneg %p99
      %p185 = pneg %p96
      %p186 = pneg %p127
      %p187 = pneg %p124
      %s188 = smul.u32 %s18, %s19
      %p189 = scmp.lt.s32.totalorder %s188, 0
      %s190 = scalar_select %p189, %s188, 0
      %s191 = scalar_lea.vmem %s3, %s190
      %p192 = scmp.lt.s32.totalorder %s19, 0
      %s193 = scalar_select %p192, %s19, 0
      %s194 = scalar_lea.vmem %s0, %s193
      %p195 = scmp.lt.s32.totalorder %s19, 0
      %s196 = scalar_select %p195, %s19, 0
      %s197 = scalar_lea.vmem %s1, %s196
      %p198 = scmp.lt.s32.totalorder %s19, 0
      %s199 = scalar_select %p198, %s19, 0
      %s200 = scalar_lea.vmem %s2, %s199
      %s201 = smul.u32 %s18, %s19
      %p202 = scmp.lt.s32.totalorder %s201, 0
      %s203 = scalar_select %p202, %s201, 0
      %s204 = scalar_lea.vmem %s3, %s203
      %s205 = smul.u32 %s18, %s19
      %v206 = vlaneseq
      %v207 = vshrl.u32 %v206, 7
      %v208 = vadd.s32 %v207, 8
      %v209 = vadd.s32 %v207, 16
      %v210 = vadd.s32 %v207, 24
      %v211 = vadd.s32 %v207, 32
      %v212 = vadd.s32 %v207, 40
      %v213 = vadd.s32 %v207, 48
      %v214 = vadd.s32 %v207, 56
      %v215 = vadd.s32 %v207, 64
      %v216 = vadd.s32 %v207, 72
      %v217 = vadd.s32 %v207, 80
      %v218 = vadd.s32 %v207, 88
      %v219 = vadd.s32 %v207, 96
      %v220 = vadd.s32 %v207, 104
      %v221 = vadd.s32 %v207, 112
      %v222 = vadd.s32 %v207, 120
      %p223 = scmp.eq.s32.totalorder %s18, 0
      // Predicated region
      $region33: #{_forward_impl.2} parent=31 // pred_check
        %p224 = pneg %p223
      $region34: #{_forward_impl.2} parent=31 // pred_check_branch
        %226 = sbr.rel (%p224) target = $region36
      $region35: #{_forward_impl.2} parent=31 // pred_region
        %p227 = scmp.eq.s32.totalorder %s19, 0
        // Predicated region
        $region37: #{_forward_impl.2} parent=35 // pred_check
          %p228 = pneg %p227
        $region38: #{_forward_impl.2} parent=35 // pred_check_branch
          %230 = sbr.rel (%p228) target = $region40
        $region39: #{_forward_impl.2} parent=35 // pred_region
          %231 = vst [vmem:[#allocation2] sm:$0xff] 0.0
          %232 = vst [vmem:[#allocation2 + $0x8] sm:$0xff] 0.0
          %233 = vst [vmem:[#allocation2 + $0x10] sm:$0xff] 0.0
          %234 = vst [vmem:[#allocation2 + $0x18] sm:$0xff] 0.0
          %235 = vst [vmem:[#allocation2 + $0x20] sm:$0xff] 0.0
          %236 = vst [vmem:[#allocation2 + $0x28] sm:$0xff] 0.0
          %237 = vst [vmem:[#allocation2 + $0x30] sm:$0xff] 0.0
          %238 = vst [vmem:[#allocation2 + $0x38] sm:$0xff] 0.0
          %239 = vst [vmem:[#allocation2 + $0x40] sm:$0xff] 0.0
          %240 = vst [vmem:[#allocation2 + $0x48] sm:$0xff] 0.0
          %241 = vst [vmem:[#allocation2 + $0x50] sm:$0xff] 0.0
          %242 = vst [vmem:[#allocation2 + $0x58] sm:$0xff] 0.0
          %243 = vst [vmem:[#allocation2 + $0x60] sm:$0xff] 0.0
          %244 = vst [vmem:[#allocation2 + $0x68] sm:$0xff] 0.0
          %245 = vst [vmem:[#allocation2 + $0x70] sm:$0xff] 0.0
          %246 = vst [vmem:[#allocation2 + $0x78] sm:$0xff] 0.0
        $region40: #{_forward_impl.2} parent=35 // pred_fallthru
          _
        %v247 = vld [vmem:[%s194] sm:$0x1]
        %v248 = vlaneseq
        %v249 = vshrl.u32 %v248, 7
        %v250 = vsub.s32 0, %v249
        %v251 = vrot.slane %v247, %v250
        %vm252 = vcmp.eq.s32.totalorder %v251, %v207
        %vm253 = vcmp.eq.s32.totalorder %v251, %v208
        %vm254 = vcmp.eq.s32.totalorder %v251, %v209
        %vm255 = vcmp.eq.s32.totalorder %v251, %v210
        %vm256 = vcmp.eq.s32.totalorder %v251, %v211
        %vm257 = vcmp.eq.s32.totalorder %v251, %v212
        %vm258 = vcmp.eq.s32.totalorder %v251, %v213
        %vm259 = vcmp.eq.s32.totalorder %v251, %v214
        %vm260 = vcmp.eq.s32.totalorder %v251, %v215
        %vm261 = vcmp.eq.s32.totalorder %v251, %v216
        %vm262 = vcmp.eq.s32.totalorder %v251, %v217
        %vm263 = vcmp.eq.s32.totalorder %v251, %v218
        %vm264 = vcmp.eq.s32.totalorder %v251, %v219
        %vm265 = vcmp.eq.s32.totalorder %v251, %v220
        %vm266 = vcmp.eq.s32.totalorder %v251, %v221
        %vm267 = vcmp.eq.s32.totalorder %v251, %v222
        %v268 = vld [vmem:[%s200] sm:$0x1]
        %v270 = vlaneseq
        %v271 = vshrl.u32 %v270, 7
        %v272 = vsub.s32 0, %v271
        %v273 = vrot.slane %v268, %v272
        %v275 = vsel %vm252, %v273, 0.0
        %v276 = vsel %vm253, %v273, 0.0
        %v277 = vsel %vm254, %v273, 0.0
        %v278 = vsel %vm255, %v273, 0.0
        %v279 = vsel %vm256, %v273, 0.0
        %v280 = vsel %vm257, %v273, 0.0
        %v281 = vsel %vm258, %v273, 0.0
        %v282 = vsel %vm259, %v273, 0.0
        %v283 = vsel %vm260, %v273, 0.0
        %v284 = vsel %vm261, %v273, 0.0
        %v285 = vsel %vm262, %v273, 0.0
        %v286 = vsel %vm263, %v273, 0.0
        %v287 = vsel %vm264, %v273, 0.0
        %v288 = vsel %vm265, %v273, 0.0
        %v289 = vsel %vm266, %v273, 0.0
        %v290 = vsel %vm267, %v273, 0.0
        %v291 = vld [vmem:[%s197] sm:$0x1]
        %v292 = vlaneseq
        %v293 = vshrl.u32 %v292, 7
        %v294 = vsub.s32 0, %v293
        %v295 = vrot.slane %v291, %v294
        %vm296 = vcmp.eq.s32.totalorder %v295, %v207
        %vm297 = vcmp.eq.s32.totalorder %v295, %v208
        %vm298 = vcmp.eq.s32.totalorder %v295, %v209
        %vm299 = vcmp.eq.s32.totalorder %v295, %v210
        %vm300 = vcmp.eq.s32.totalorder %v295, %v211
        %vm301 = vcmp.eq.s32.totalorder %v295, %v212
        %vm302 = vcmp.eq.s32.totalorder %v295, %v213
        %vm303 = vcmp.eq.s32.totalorder %v295, %v214
        %vm304 = vcmp.eq.s32.totalorder %v295, %v215
        %vm305 = vcmp.eq.s32.totalorder %v295, %v216
        %vm306 = vcmp.eq.s32.totalorder %v295, %v217
        %vm307 = vcmp.eq.s32.totalorder %v295, %v218
        %vm308 = vcmp.eq.s32.totalorder %v295, %v219
        %vm309 = vcmp.eq.s32.totalorder %v295, %v220
        %vm310 = vcmp.eq.s32.totalorder %v295, %v221
        %vm311 = vcmp.eq.s32.totalorder %v295, %v222
        %v312 = vsel %vm296, 1, 0
        %v313 = vsel %vm297, 1, 0
        %v314 = vsel %vm298, 1, 0
        %v315 = vsel %vm299, 1, 0
        %v316 = vsel %vm300, 1, 0
        %v317 = vsel %vm301, 1, 0
        %v318 = vsel %vm302, 1, 0
        %v319 = vsel %vm303, 1, 0
        %v320 = vsel %vm304, 1, 0
        %v321 = vsel %vm305, 1, 0
        %v322 = vsel %vm306, 1, 0
        %v323 = vsel %vm307, 1, 0
        %v324 = vsel %vm308, 1, 0
        %v325 = vsel %vm309, 1, 0
        %v326 = vsel %vm310, 1, 0
        %v327 = vsel %vm311, 1, 0
        %v328 = vcvt.s32.f32 %v312
        %v329 = vcvt.s32.f32 %v313
        %v330 = vcvt.s32.f32 %v314
        %v331 = vcvt.s32.f32 %v315
        %v332 = vcvt.s32.f32 %v316
        %v333 = vcvt.s32.f32 %v317
        %v334 = vcvt.s32.f32 %v318
        %v335 = vcvt.s32.f32 %v319
        %v336 = vcvt.s32.f32 %v320
        %v337 = vcvt.s32.f32 %v321
        %v338 = vcvt.s32.f32 %v322
        %v339 = vcvt.s32.f32 %v323
        %v340 = vcvt.s32.f32 %v324
        %v341 = vcvt.s32.f32 %v325
        %v342 = vcvt.s32.f32 %v326
        %v343 = vcvt.s32.f32 %v327
        %v344 = vld [vmem:[#allocation2] sm:$0xff]
        %v345 = vld [vmem:[#allocation2 + $0x8] sm:$0xff]
        %v346 = vld [vmem:[#allocation2 + $0x10] sm:$0xff]
        %v347 = vld [vmem:[#allocation2 + $0x18] sm:$0xff]
        %v348 = vld [vmem:[#allocation2 + $0x20] sm:$0xff]
        %v349 = vld [vmem:[#allocation2 + $0x28] sm:$0xff]
        %v350 = vld [vmem:[#allocation2 + $0x30] sm:$0xff]
        %v351 = vld [vmem:[#allocation2 + $0x38] sm:$0xff]
        %v352 = vld [vmem:[#allocation2 + $0x40] sm:$0xff]
        %v353 = vld [vmem:[#allocation2 + $0x48] sm:$0xff]
        %v354 = vld [vmem:[#allocation2 + $0x50] sm:$0xff]
        %v355 = vld [vmem:[#allocation2 + $0x58] sm:$0xff]
        %v356 = vld [vmem:[#allocation2 + $0x60] sm:$0xff]
        %v357 = vld [vmem:[#allocation2 + $0x68] sm:$0xff]
        %v358 = vld [vmem:[#allocation2 + $0x70] sm:$0xff]
        %v359 = vld [vmem:[#allocation2 + $0x78] sm:$0xff]
        %360 = vmatprep.subr.mxu0 0.0
        %361 = vmatpush1.xpose.msra.mxu0 %v343
        %362 = vmatprep.subr.mxu0 0.0
        %363 = vmatpush1.xpose.msra.mxu0 %v342
        %364 = vmatprep.subr.mxu0 0.0
        %365 = vmatpush1.xpose.msra.mxu0 %v341
        %366 = vmatprep.subr.mxu0 0.0
        %367 = vmatpush1.xpose.msra.mxu0 %v340
        %368 = vmatprep.subr.mxu0 0.0
        %369 = vmatpush1.xpose.msra.mxu0 %v339
        %370 = vmatprep.subr.mxu0 0.0
        %371 = vmatpush1.xpose.msra.mxu0 %v338
        %372 = vmatprep.subr.mxu0 0.0
        %373 = vmatpush1.xpose.msra.mxu0 %v337
        %374 = vmatprep.subr.mxu0 0.0
        %375 = vmatpush1.xpose.msra.mxu0 %v336
        %376 = vmatprep.subr.mxu0 0.0
        %377 = vmatpush1.xpose.msra.mxu0 %v335
        %378 = vmatprep.subr.mxu0 0.0
        %379 = vmatpush1.xpose.msra.mxu0 %v334
        %380 = vmatprep.subr.mxu0 0.0
        %381 = vmatpush1.xpose.msra.mxu0 %v333
        %382 = vmatprep.subr.mxu0 0.0
        %383 = vmatpush1.xpose.msra.mxu0 %v332
        %384 = vmatprep.subr.mxu0 0.0
        %385 = vmatpush1.xpose.msra.mxu0 %v331
        %386 = vmatprep.subr.mxu0 0.0
        %387 = vmatpush1.xpose.msra.mxu0 %v330
        %388 = vmatprep.subr.mxu0 0.0
        %389 = vmatpush1.xpose.msra.mxu0 %v329
        %390 = vmatprep.subr.mxu0 0.0
        %391 = vmatpush1.xpose.msra.mxu0 %v328
        %392 = vmatprep.subr.mxu0 0.0
        %393 = vmatpush2.xpose.msra.mxu0 0.0
        %394 = vmatprep.subr.mxu0 0.0
        %395 = vmatpush2.xpose.msra.mxu0 0.0
        %396 = vmatprep.subr.mxu0 0.0
        %397 = vmatpush2.xpose.msra.mxu0 0.0
        %398 = vmatprep.subr.mxu0 0.0
        %399 = vmatpush2.xpose.msra.mxu0 0.0
        %400 = vmatprep.subr.mxu0 0.0
        %401 = vmatpush2.xpose.msra.mxu0 0.0
        %402 = vmatprep.subr.mxu0 0.0
        %403 = vmatpush2.xpose.msra.mxu0 0.0
        %404 = vmatprep.subr.mxu0 0.0
        %405 = vmatpush2.xpose.msra.mxu0 0.0
        %406 = vmatprep.subr.mxu0 0.0
        %407 = vmatpush2.xpose.msra.mxu0 0.0
        %408 = vmatprep.subr.mxu0 0.0
        %409 = vmatpush2.xpose.msra.mxu0 0.0
        %410 = vmatprep.subr.mxu0 0.0
        %411 = vmatpush2.xpose.msra.mxu0 0.0
        %412 = vmatprep.subr.mxu0 0.0
        %413 = vmatpush2.xpose.msra.mxu0 0.0
        %414 = vmatprep.subr.mxu0 0.0
        %415 = vmatpush2.xpose.msra.mxu0 0.0
        %416 = vmatprep.subr.mxu0 0.0
        %417 = vmatpush2.xpose.msra.mxu0 0.0
        %418 = vmatprep.subr.mxu0 0.0
        %419 = vmatpush2.xpose.msra.mxu0 0.0
        %420 = vmatprep.subr.mxu0 0.0
        %421 = vmatpush2.xpose.msra.mxu0 0.0
        %422 = vmatprep.subr.mxu0 0.0
        %423 = vmatpush2.xpose.msra.mxu0 0.0
        %424 = vmatprep.mubr.f32.mxu0 0.0
        %425 = vmatmul.mubr.f32.gmra.mxu0 %v275
        %v426 = vpop.f32.mrf.mxu0
        %v427 = vadd.f32 0.0, %v426
        %v428 = vpop.f32.mrf.mxu0
        %429 = vmatprep.mubr.f32.mxu0 0.0
        %430 = vmatmul.mubr.f32.gmra.mxu0 %v276
        %v431 = vpop.f32.mrf.mxu0
        %v432 = vadd.f32 0.0, %v431
        %v433 = vpop.f32.mrf.mxu0
        %434 = vmatprep.mubr.f32.mxu0 0.0
        %435 = vmatmul.mubr.f32.gmra.mxu0 %v277
        %v436 = vpop.f32.mrf.mxu0
        %v437 = vadd.f32 0.0, %v436
        %v438 = vpop.f32.mrf.mxu0
        %439 = vmatprep.mubr.f32.mxu0 0.0
        %440 = vmatmul.mubr.f32.gmra.mxu0 %v278
        %v441 = vpop.f32.mrf.mxu0
        %v442 = vadd.f32 0.0, %v441
        %v443 = vpop.f32.mrf.mxu0
        %444 = vmatprep.mubr.f32.mxu0 0.0
        %445 = vmatmul.mubr.f32.gmra.mxu0 %v279
        %v446 = vpop.f32.mrf.mxu0
        %v447 = vadd.f32 0.0, %v446
        %v448 = vpop.f32.mrf.mxu0
        %449 = vmatprep.mubr.f32.mxu0 0.0
        %450 = vmatmul.mubr.f32.gmra.mxu0 %v280
        %v451 = vpop.f32.mrf.mxu0
        %v452 = vadd.f32 0.0, %v451
        %v453 = vpop.f32.mrf.mxu0
        %454 = vmatprep.mubr.f32.mxu0 0.0
        %455 = vmatmul.mubr.f32.gmra.mxu0 %v281
        %v456 = vpop.f32.mrf.mxu0
        %v457 = vadd.f32 0.0, %v456
        %v458 = vpop.f32.mrf.mxu0
        %459 = vmatprep.mubr.f32.mxu0 0.0
        %460 = vmatmul.mubr.f32.gmra.mxu0 %v282
        %v461 = vpop.f32.mrf.mxu0
        %v462 = vadd.f32 0.0, %v461
        %v463 = vpop.f32.mrf.mxu0
        %464 = vmatprep.mubr.f32.mxu0 0.0
        %465 = vmatmul.mubr.f32.gmra.mxu0 %v283
        %v466 = vpop.f32.mrf.mxu0
        %v467 = vadd.f32 0.0, %v466
        %v468 = vpop.f32.mrf.mxu0
        %469 = vmatprep.mubr.f32.mxu0 0.0
        %470 = vmatmul.mubr.f32.gmra.mxu0 %v284
        %v471 = vpop.f32.mrf.mxu0
        %v472 = vadd.f32 0.0, %v471
        %v473 = vpop.f32.mrf.mxu0
        %474 = vmatprep.mubr.f32.mxu0 0.0
        %475 = vmatmul.mubr.f32.gmra.mxu0 %v285
        %v476 = vpop.f32.mrf.mxu0
        %v477 = vadd.f32 0.0, %v476
        %v478 = vpop.f32.mrf.mxu0
        %479 = vmatprep.mubr.f32.mxu0 0.0
        %480 = vmatmul.mubr.f32.gmra.mxu0 %v286
        %v481 = vpop.f32.mrf.mxu0
        %v482 = vadd.f32 0.0, %v481
        %v483 = vpop.f32.mrf.mxu0
        %484 = vmatprep.mubr.f32.mxu0 0.0
        %485 = vmatmul.mubr.f32.gmra.mxu0 %v287
        %v486 = vpop.f32.mrf.mxu0
        %v487 = vadd.f32 0.0, %v486
        %v488 = vpop.f32.mrf.mxu0
        %489 = vmatprep.mubr.f32.mxu0 0.0
        %490 = vmatmul.mubr.f32.gmra.mxu0 %v288
        %v491 = vpop.f32.mrf.mxu0
        %v492 = vadd.f32 0.0, %v491
        %v493 = vpop.f32.mrf.mxu0
        %494 = vmatprep.mubr.f32.mxu0 0.0
        %495 = vmatmul.mubr.f32.gmra.mxu0 %v289
        %v496 = vpop.f32.mrf.mxu0
        %v497 = vadd.f32 0.0, %v496
        %v498 = vpop.f32.mrf.mxu0
        %499 = vmatprep.mubr.f32.mxu0 0.0
        %500 = vmatmul.mubr.f32.gmra.mxu0 %v290
        %v501 = vpop.f32.mrf.mxu0
        %v502 = vadd.f32 0.0, %v501
        %v503 = vpop.f32.mrf.mxu0
        %504 = vdwg.mxu0
        %v505 = vadd.f32 %v344, %v427
        %v506 = vadd.f32 %v345, %v432
        %v507 = vadd.f32 %v346, %v437
        %v508 = vadd.f32 %v347, %v442
        %v509 = vadd.f32 %v348, %v447
        %v510 = vadd.f32 %v349, %v452
        %v511 = vadd.f32 %v350, %v457
        %v512 = vadd.f32 %v351, %v462
        %v513 = vadd.f32 %v352, %v467
        %v514 = vadd.f32 %v353, %v472
        %v515 = vadd.f32 %v354, %v477
        %v516 = vadd.f32 %v355, %v482
        %v517 = vadd.f32 %v356, %v487
        %v518 = vadd.f32 %v357, %v492
        %v519 = vadd.f32 %v358, %v497
        %v520 = vadd.f32 %v359, %v502
        %521 = vst [vmem:[#allocation2] sm:$0xff] %v505
        %522 = vst [vmem:[#allocation2 + $0x8] sm:$0xff] %v506
        %523 = vst [vmem:[#allocation2 + $0x10] sm:$0xff] %v507
        %524 = vst [vmem:[#allocation2 + $0x18] sm:$0xff] %v508
        %525 = vst [vmem:[#allocation2 + $0x20] sm:$0xff] %v509
        %526 = vst [vmem:[#allocation2 + $0x28] sm:$0xff] %v510
        %527 = vst [vmem:[#allocation2 + $0x30] sm:$0xff] %v511
        %528 = vst [vmem:[#allocation2 + $0x38] sm:$0xff] %v512
        %529 = vst [vmem:[#allocation2 + $0x40] sm:$0xff] %v513
        %530 = vst [vmem:[#allocation2 + $0x48] sm:$0xff] %v514
        %531 = vst [vmem:[#allocation2 + $0x50] sm:$0xff] %v515
        %532 = vst [vmem:[#allocation2 + $0x58] sm:$0xff] %v516
        %533 = vst [vmem:[#allocation2 + $0x60] sm:$0xff] %v517
        %534 = vst [vmem:[#allocation2 + $0x68] sm:$0xff] %v518
        %535 = vst [vmem:[#allocation2 + $0x70] sm:$0xff] %v519
        %536 = vst [vmem:[#allocation2 + $0x78] sm:$0xff] %v520
        // Predicated region
        $region41: #{_forward_impl.2} parent=35 // pred_check
          %p537 = pneg %p227
        $region42: #{_forward_impl.2} parent=35 // pred_check_branch
          %539 = sbr.rel (%p537) target = $region44
        $region43: #{_forward_impl.2} parent=35 // pred_region
          %v540 = vld [vmem:[#allocation2] sm:$0xff]
          %v541 = vld [vmem:[#allocation2 + $0x8] sm:$0xff]
          %v542 = vld [vmem:[#allocation2 + $0x10] sm:$0xff]
          %v543 = vld [vmem:[#allocation2 + $0x18] sm:$0xff]
          %v544 = vld [vmem:[#allocation2 + $0x20] sm:$0xff]
          %v545 = vld [vmem:[#allocation2 + $0x28] sm:$0xff]
          %v546 = vld [vmem:[#allocation2 + $0x30] sm:$0xff]
          %v547 = vld [vmem:[#allocation2 + $0x38] sm:$0xff]
          %v548 = vld [vmem:[#allocation2 + $0x40] sm:$0xff]
          %v549 = vld [vmem:[#allocation2 + $0x48] sm:$0xff]
          %v550 = vld [vmem:[#allocation2 + $0x50] sm:$0xff]
          %v551 = vld [vmem:[#allocation2 + $0x58] sm:$0xff]
          %v552 = vld [vmem:[#allocation2 + $0x60] sm:$0xff]
          %v553 = vld [vmem:[#allocation2 + $0x68] sm:$0xff]
          %v554 = vld [vmem:[#allocation2 + $0x70] sm:$0xff]
          %v555 = vld [vmem:[#allocation2 + $0x78] sm:$0xff]
          %556 = vxpose.xlu0.b32.start [1/16] %v540, 128
          %557 = vxpose.xlu0.b32.cont [2/16] %v541, 128
          %558 = vxpose.xlu0.b32.cont [3/16] %v542, 128
          %559 = vxpose.xlu0.b32.cont [4/16] %v543, 128
          %560 = vxpose.xlu0.b32.cont [5/16] %v544, 128
          %561 = vxpose.xlu0.b32.cont [6/16] %v545, 128
          %562 = vxpose.xlu0.b32.cont [7/16] %v546, 128
          %563 = vxpose.xlu0.b32.cont [8/16] %v547, 128
          %564 = vxpose.xlu0.b32.cont [9/16] %v548, 128
          %565 = vxpose.xlu0.b32.cont [10/16] %v549, 128
          %566 = vxpose.xlu0.b32.cont [11/16] %v550, 128
          %567 = vxpose.xlu0.b32.cont [12/16] %v551, 128
          %568 = vxpose.xlu0.b32.cont [13/16] %v552, 128
          %569 = vxpose.xlu0.b32.cont [14/16] %v553, 128
          %570 = vxpose.xlu0.b32.cont [15/16] %v554, 128
          %571 = vxpose.xlu0.b32.end [16/16] %v555, 128
          %v572 = vpop.trf.xlu0
          %v573 = vpop.trf.xlu0
          %v574 = vpop.trf.xlu0
          %v575 = vpop.trf.xlu0
          %v576 = vpop.trf.xlu0
          %v577 = vpop.trf.xlu0
          %v578 = vpop.trf.xlu0
          %v579 = vpop.trf.xlu0
          %v580 = vpop.trf.xlu0
          %v581 = vpop.trf.xlu0
          %v582 = vpop.trf.xlu0
          %v583 = vpop.trf.xlu0
          %v584 = vpop.trf.xlu0
          %v585 = vpop.trf.xlu0
          %v586 = vpop.trf.xlu0
          %v587 = vpop.trf.xlu0
          %v588 = vadd.f32 %v540, %v572
          %v589 = vadd.f32 %v541, %v573
          %v590 = vadd.f32 %v542, %v574
          %v591 = vadd.f32 %v543, %v575
          %v592 = vadd.f32 %v544, %v576
          %v593 = vadd.f32 %v545, %v577
          %v594 = vadd.f32 %v546, %v578
          %v595 = vadd.f32 %v547, %v579
          %v596 = vadd.f32 %v548, %v580
          %v597 = vadd.f32 %v549, %v581
          %v598 = vadd.f32 %v550, %v582
          %v599 = vadd.f32 %v551, %v583
          %v600 = vadd.f32 %v552, %v584
          %v601 = vadd.f32 %v553, %v585
          %v602 = vadd.f32 %v554, %v586
          %v603 = vadd.f32 %v555, %v587
          %v604 = vmul.f32 %v588, 0.5
          %v605 = vmul.f32 %v589, 0.5
          %v606 = vmul.f32 %v590, 0.5
          %v607 = vmul.f32 %v591, 0.5
          %v608 = vmul.f32 %v592, 0.5
          %v609 = vmul.f32 %v593, 0.5
          %v610 = vmul.f32 %v594, 0.5
          %v611 = vmul.f32 %v595, 0.5
          %v612 = vmul.f32 %v596, 0.5
          %v613 = vmul.f32 %v597, 0.5
          %v614 = vmul.f32 %v598, 0.5
          %v615 = vmul.f32 %v599, 0.5
          %v616 = vmul.f32 %v600, 0.5
          %v617 = vmul.f32 %v601, 0.5
          %v618 = vmul.f32 %v602, 0.5
          %v619 = vmul.f32 %v603, 0.5
          %620 = vst [vmem:[#allocation2] sm:$0xff] %v604
          %621 = vst [vmem:[#allocation2 + $0x8] sm:$0xff] %v605
          %622 = vst [vmem:[#allocation2 + $0x10] sm:$0xff] %v606
          %623 = vst [vmem:[#allocation2 + $0x18] sm:$0xff] %v607
          %624 = vst [vmem:[#allocation2 + $0x20] sm:$0xff] %v608
          %625 = vst [vmem:[#allocation2 + $0x28] sm:$0xff] %v609
          %626 = vst [vmem:[#allocation2 + $0x30] sm:$0xff] %v610
          %627 = vst [vmem:[#allocation2 + $0x38] sm:$0xff] %v611
          %628 = vst [vmem:[#allocation2 + $0x40] sm:$0xff] %v612
          %629 = vst [vmem:[#allocation2 + $0x48] sm:$0xff] %v613
          %630 = vst [vmem:[#allocation2 + $0x50] sm:$0xff] %v614
          %631 = vst [vmem:[#allocation2 + $0x58] sm:$0xff] %v615
          %632 = vst [vmem:[#allocation2 + $0x60] sm:$0xff] %v616
          %633 = vst [vmem:[#allocation2 + $0x68] sm:$0xff] %v617
          %634 = vst [vmem:[#allocation2 + $0x70] sm:$0xff] %v618
          %635 = vst [vmem:[#allocation2 + $0x78] sm:$0xff] %v619
        $region44: #{_forward_impl.2} parent=35 // pred_fallthru
          _
      $region36: #{_forward_impl.2} parent=31 // pred_fallthru
        _
      %p636 = scmp.eq.s32.totalorder %s18, 1
      // Predicated region
      $region45: #{_forward_impl.2} parent=31 // pred_check
        %p637 = pneg %p636
      $region46: #{_forward_impl.2} parent=31 // pred_check_branch
        %639 = sbr.rel (%p637) target = $region48
      $region47: #{_forward_impl.2} parent=31 // pred_region
        %v640 = vld [vmem:[%s197] sm:$0x1]
        %v641 = vlaneseq
        %v642 = vshrl.u32 %v641, 7
        %v643 = vsub.s32 0, %v642
        %v644 = vrot.slane %v640, %v643
        %vm645 = vcmp.eq.s32.totalorder %v644, %v207
        %vm646 = vcmp.eq.s32.totalorder %v644, %v208
        %vm647 = vcmp.eq.s32.totalorder %v644, %v209
        %vm648 = vcmp.eq.s32.totalorder %v644, %v210
        %vm649 = vcmp.eq.s32.totalorder %v644, %v211
        %vm650 = vcmp.eq.s32.totalorder %v644, %v212
        %vm651 = vcmp.eq.s32.totalorder %v644, %v213
        %vm652 = vcmp.eq.s32.totalorder %v644, %v214
        %vm653 = vcmp.eq.s32.totalorder %v644, %v215
        %vm654 = vcmp.eq.s32.totalorder %v644, %v216
        %vm655 = vcmp.eq.s32.totalorder %v644, %v217
        %vm656 = vcmp.eq.s32.totalorder %v644, %v218
        %vm657 = vcmp.eq.s32.totalorder %v644, %v219
        %vm658 = vcmp.eq.s32.totalorder %v644, %v220
        %vm659 = vcmp.eq.s32.totalorder %v644, %v221
        %vm660 = vcmp.eq.s32.totalorder %v644, %v222
        %v661 = vsel %vm645, 1, 0
        %v662 = vsel %vm646, 1, 0
        %v663 = vsel %vm647, 1, 0
        %v664 = vsel %vm648, 1, 0
        %v665 = vsel %vm649, 1, 0
        %v666 = vsel %vm650, 1, 0
        %v667 = vsel %vm651, 1, 0
        %v668 = vsel %vm652, 1, 0
        %v669 = vsel %vm653, 1, 0
        %v670 = vsel %vm654, 1, 0
        %v671 = vsel %vm655, 1, 0
        %v672 = vsel %vm656, 1, 0
        %v673 = vsel %vm657, 1, 0
        %v674 = vsel %vm658, 1, 0
        %v675 = vsel %vm659, 1, 0
        %v676 = vsel %vm660, 1, 0
        %v677 = vcvt.s32.f32 %v661
        %v678 = vcvt.s32.f32 %v662
        %v679 = vcvt.s32.f32 %v663
        %v680 = vcvt.s32.f32 %v664
        %v681 = vcvt.s32.f32 %v665
        %v682 = vcvt.s32.f32 %v666
        %v683 = vcvt.s32.f32 %v667
        %v684 = vcvt.s32.f32 %v668
        %v685 = vcvt.s32.f32 %v669
        %v686 = vcvt.s32.f32 %v670
        %v687 = vcvt.s32.f32 %v671
        %v688 = vcvt.s32.f32 %v672
        %v689 = vcvt.s32.f32 %v673
        %v690 = vcvt.s32.f32 %v674
        %v691 = vcvt.s32.f32 %v675
        %v692 = vcvt.s32.f32 %v676
        %v693 = vld [vmem:[#allocation2] sm:$0xff]
        %v694 = vld [vmem:[#allocation2 + $0x8] sm:$0xff]
        %v695 = vld [vmem:[#allocation2 + $0x10] sm:$0xff]
        %v696 = vld [vmem:[#allocation2 + $0x18] sm:$0xff]
        %v697 = vld [vmem:[#allocation2 + $0x20] sm:$0xff]
        %v698 = vld [vmem:[#allocation2 + $0x28] sm:$0xff]
        %v699 = vld [vmem:[#allocation2 + $0x30] sm:$0xff]
        %v700 = vld [vmem:[#allocation2 + $0x38] sm:$0xff]
        %v701 = vld [vmem:[#allocation2 + $0x40] sm:$0xff]
        %v702 = vld [vmem:[#allocation2 + $0x48] sm:$0xff]
        %v703 = vld [vmem:[#allocation2 + $0x50] sm:$0xff]
        %v704 = vld [vmem:[#allocation2 + $0x58] sm:$0xff]
        %v705 = vld [vmem:[#allocation2 + $0x60] sm:$0xff]
        %v706 = vld [vmem:[#allocation2 + $0x68] sm:$0xff]
        %v707 = vld [vmem:[#allocation2 + $0x70] sm:$0xff]
        %v708 = vld [vmem:[#allocation2 + $0x78] sm:$0xff]
        %709 = vmatprep.subr.mxu0 0.0
        %710 = vmatpush1.msra.mxu0 %v692
        %711 = vmatprep.subr.mxu0 0.0
        %712 = vmatpush1.msra.mxu0 %v691
        %713 = vmatprep.subr.mxu0 0.0
        %714 = vmatpush1.msra.mxu0 %v690
        %715 = vmatprep.subr.mxu0 0.0
        %716 = vmatpush1.msra.mxu0 %v689
        %717 = vmatprep.subr.mxu0 0.0
        %718 = vmatpush1.msra.mxu0 %v688
        %719 = vmatprep.subr.mxu0 0.0
        %720 = vmatpush1.msra.mxu0 %v687
        %721 = vmatprep.subr.mxu0 0.0
        %722 = vmatpush1.msra.mxu0 %v686
        %723 = vmatprep.subr.mxu0 0.0
        %724 = vmatpush1.msra.mxu0 %v685
        %725 = vmatprep.subr.mxu0 0.0
        %726 = vmatpush1.msra.mxu0 %v684
        %727 = vmatprep.subr.mxu0 0.0
        %728 = vmatpush1.msra.mxu0 %v683
        %729 = vmatprep.subr.mxu0 0.0
        %730 = vmatpush1.msra.mxu0 %v682
        %731 = vmatprep.subr.mxu0 0.0
        %732 = vmatpush1.msra.mxu0 %v681
        %733 = vmatprep.subr.mxu0 0.0
        %734 = vmatpush1.msra.mxu0 %v680
        %735 = vmatprep.subr.mxu0 0.0
        %736 = vmatpush1.msra.mxu0 %v679
        %737 = vmatprep.subr.mxu0 0.0
        %738 = vmatpush1.msra.mxu0 %v678
        %739 = vmatprep.subr.mxu0 0.0
        %740 = vmatpush1.msra.mxu0 %v677
        %741 = vmatprep.subr.mxu0 0.0
        %742 = vmatpush2.msra.mxu0 0.0
        %743 = vmatprep.subr.mxu0 0.0
        %744 = vmatpush2.msra.mxu0 0.0
        %745 = vmatprep.subr.mxu0 0.0
        %746 = vmatpush2.msra.mxu0 0.0
        %747 = vmatprep.subr.mxu0 0.0
        %748 = vmatpush2.msra.mxu0 0.0
        %749 = vmatprep.subr.mxu0 0.0
        %750 = vmatpush2.msra.mxu0 0.0
        %751 = vmatprep.subr.mxu0 0.0
        %752 = vmatpush2.msra.mxu0 0.0
        %753 = vmatprep.subr.mxu0 0.0
        %754 = vmatpush2.msra.mxu0 0.0
        %755 = vmatprep.subr.mxu0 0.0
        %756 = vmatpush2.msra.mxu0 0.0
        %757 = vmatprep.subr.mxu0 0.0
        %758 = vmatpush2.msra.mxu0 0.0
        %759 = vmatprep.subr.mxu0 0.0
        %760 = vmatpush2.msra.mxu0 0.0
        %761 = vmatprep.subr.mxu0 0.0
        %762 = vmatpush2.msra.mxu0 0.0
        %763 = vmatprep.subr.mxu0 0.0
        %764 = vmatpush2.msra.mxu0 0.0
        %765 = vmatprep.subr.mxu0 0.0
        %766 = vmatpush2.msra.mxu0 0.0
        %767 = vmatprep.subr.mxu0 0.0
        %768 = vmatpush2.msra.mxu0 0.0
        %769 = vmatprep.subr.mxu0 0.0
        %770 = vmatpush2.msra.mxu0 0.0
        %771 = vmatprep.subr.mxu0 0.0
        %772 = vmatpush2.msra.mxu0 0.0
        %773 = vmatprep.mubr.f32.mxu0 0.0
        %774 = vmatmul.mubr.f32.gmra.mxu0 %v693
        %v775 = vpop.f32.mrf.mxu0
        %v776 = vadd.f32 0.0, %v775
        %v777 = vpop.f32.mrf.mxu0
        %778 = vmatprep.mubr.f32.mxu0 0.0
        %779 = vmatmul.mubr.f32.gmra.mxu0 %v694
        %v780 = vpop.f32.mrf.mxu0
        %v781 = vadd.f32 0.0, %v780
        %v782 = vpop.f32.mrf.mxu0
        %783 = vmatprep.mubr.f32.mxu0 0.0
        %784 = vmatmul.mubr.f32.gmra.mxu0 %v695
        %v785 = vpop.f32.mrf.mxu0
        %v786 = vadd.f32 0.0, %v785
        %v787 = vpop.f32.mrf.mxu0
        %788 = vmatprep.mubr.f32.mxu0 0.0
        %789 = vmatmul.mubr.f32.gmra.mxu0 %v696
        %v790 = vpop.f32.mrf.mxu0
        %v791 = vadd.f32 0.0, %v790
        %v792 = vpop.f32.mrf.mxu0
        %793 = vmatprep.mubr.f32.mxu0 0.0
        %794 = vmatmul.mubr.f32.gmra.mxu0 %v697
        %v795 = vpop.f32.mrf.mxu0
        %v796 = vadd.f32 0.0, %v795
        %v797 = vpop.f32.mrf.mxu0
        %798 = vmatprep.mubr.f32.mxu0 0.0
        %799 = vmatmul.mubr.f32.gmra.mxu0 %v698
        %v800 = vpop.f32.mrf.mxu0
        %v801 = vadd.f32 0.0, %v800
        %v802 = vpop.f32.mrf.mxu0
        %803 = vmatprep.mubr.f32.mxu0 0.0
        %804 = vmatmul.mubr.f32.gmra.mxu0 %v699
        %v805 = vpop.f32.mrf.mxu0
        %v806 = vadd.f32 0.0, %v805
        %v807 = vpop.f32.mrf.mxu0
        %808 = vmatprep.mubr.f32.mxu0 0.0
        %809 = vmatmul.mubr.f32.gmra.mxu0 %v700
        %v810 = vpop.f32.mrf.mxu0
        %v811 = vadd.f32 0.0, %v810
        %v812 = vpop.f32.mrf.mxu0
        %813 = vmatprep.mubr.f32.mxu0 0.0
        %814 = vmatmul.mubr.f32.gmra.mxu0 %v701
        %v815 = vpop.f32.mrf.mxu0
        %v816 = vadd.f32 0.0, %v815
        %v817 = vpop.f32.mrf.mxu0
        %818 = vmatprep.mubr.f32.mxu0 0.0
        %819 = vmatmul.mubr.f32.gmra.mxu0 %v702
        %v820 = vpop.f32.mrf.mxu0
        %v821 = vadd.f32 0.0, %v820
        %v822 = vpop.f32.mrf.mxu0
        %823 = vmatprep.mubr.f32.mxu0 0.0
        %824 = vmatmul.mubr.f32.gmra.mxu0 %v703
        %v825 = vpop.f32.mrf.mxu0
        %v826 = vadd.f32 0.0, %v825
        %v827 = vpop.f32.mrf.mxu0
        %828 = vmatprep.mubr.f32.mxu0 0.0
        %829 = vmatmul.mubr.f32.gmra.mxu0 %v704
        %v830 = vpop.f32.mrf.mxu0
        %v831 = vadd.f32 0.0, %v830
        %v832 = vpop.f32.mrf.mxu0
        %833 = vmatprep.mubr.f32.mxu0 0.0
        %834 = vmatmul.mubr.f32.gmra.mxu0 %v705
        %v835 = vpop.f32.mrf.mxu0
        %v836 = vadd.f32 0.0, %v835
        %v837 = vpop.f32.mrf.mxu0
        %838 = vmatprep.mubr.f32.mxu0 0.0
        %839 = vmatmul.mubr.f32.gmra.mxu0 %v706
        %v840 = vpop.f32.mrf.mxu0
        %v841 = vadd.f32 0.0, %v840
        %v842 = vpop.f32.mrf.mxu0
        %843 = vmatprep.mubr.f32.mxu0 0.0
        %844 = vmatmul.mubr.f32.gmra.mxu0 %v707
        %v845 = vpop.f32.mrf.mxu0
        %v846 = vadd.f32 0.0, %v845
        %v847 = vpop.f32.mrf.mxu0
        %848 = vmatprep.mubr.f32.mxu0 0.0
        %849 = vmatmul.mubr.f32.gmra.mxu0 %v708
        %v850 = vpop.f32.mrf.mxu0
        %v851 = vadd.f32 0.0, %v850
        %v852 = vpop.f32.mrf.mxu0
        %853 = vdwg.mxu0
        %v854 = vld [vmem:[%s194] sm:$0x1]
        %v855 = vlaneseq
        %v856 = vshrl.u32 %v855, 7
        %v857 = vsub.s32 0, %v856
        %v858 = vrot.slane %v854, %v857
        %vm859 = vcmp.eq.s32.totalorder %v858, %v207
        %vm860 = vcmp.eq.s32.totalorder %v858, %v208
        %vm861 = vcmp.eq.s32.totalorder %v858, %v209
        %vm862 = vcmp.eq.s32.totalorder %v858, %v210
        %vm863 = vcmp.eq.s32.totalorder %v858, %v211
        %vm864 = vcmp.eq.s32.totalorder %v858, %v212
        %vm865 = vcmp.eq.s32.totalorder %v858, %v213
        %vm866 = vcmp.eq.s32.totalorder %v858, %v214
        %vm867 = vcmp.eq.s32.totalorder %v858, %v215
        %vm868 = vcmp.eq.s32.totalorder %v858, %v216
        %vm869 = vcmp.eq.s32.totalorder %v858, %v217
        %vm870 = vcmp.eq.s32.totalorder %v858, %v218
        %vm871 = vcmp.eq.s32.totalorder %v858, %v219
        %vm872 = vcmp.eq.s32.totalorder %v858, %v220
        %vm873 = vcmp.eq.s32.totalorder %v858, %v221
        %vm874 = vcmp.eq.s32.totalorder %v858, %v222
        %v875 = vsel %vm859, %v776, 0.0
        %v876 = vsel %vm860, %v781, 0.0
        %v877 = vsel %vm861, %v786, 0.0
        %v878 = vsel %vm862, %v791, 0.0
        %v879 = vsel %vm863, %v796, 0.0
        %v880 = vsel %vm864, %v801, 0.0
        %v881 = vsel %vm865, %v806, 0.0
        %v882 = vsel %vm866, %v811, 0.0
        %v883 = vsel %vm867, %v816, 0.0
        %v884 = vsel %vm868, %v821, 0.0
        %v885 = vsel %vm869, %v826, 0.0
        %v886 = vsel %vm870, %v831, 0.0
        %v887 = vsel %vm871, %v836, 0.0
        %v888 = vsel %vm872, %v841, 0.0
        %v889 = vsel %vm873, %v846, 0.0
        %v890 = vsel %vm874, %v851, 0.0
        %v891 = vadd.f32 %v875, %v876
        %v892 = vadd.f32 %v891, %v877
        %v893 = vadd.f32 %v892, %v878
        %v894 = vadd.f32 %v893, %v879
        %v895 = vadd.f32 %v894, %v880
        %v896 = vadd.f32 %v895, %v881
        %v897 = vadd.f32 %v896, %v882
        %v898 = vadd.f32 %v897, %v883
        %v899 = vadd.f32 %v898, %v884
        %v900 = vadd.f32 %v899, %v885
        %v901 = vadd.f32 %v900, %v886
        %v902 = vadd.f32 %v901, %v887
        %v903 = vadd.f32 %v902, %v888
        %v904 = vadd.f32 %v903, %v889
        %v905 = vadd.f32 %v904, %v890
        %v906 = vrot.slane %v905, 4
        %v907 = vadd.f32 %v905, %v906
        %v908 = vrot.slane %v907, 2
        %v909 = vadd.f32 %v907, %v908
        %v910 = vrot.slane %v909, 1
        %v911 = vadd.f32 %v909, %v910
        %912 = vst [vmem:[%s204] sm:$0x1] %v911
      $region48: #{_forward_impl.2} parent=31 // pred_fallthru
        _
      %s913 = smul.u32 %s18, %s19
      %p914 = scmp.lt.s32.totalorder %s913, 0
      %s915 = scalar_select %p914, %s913, 0
      %s916 = scalar_lea.vmem %s3, %s915
      // Predicated region
      $region49: #{_forward_impl.2} parent=31 // pred_check
        %p917 = pneg %p124
      $region50: #{_forward_impl.2} parent=31 // pred_check_branch
        %919 = sbr.rel (%p917) target = $region52
      $region51: #{_forward_impl.2} parent=31 // pred_region
        %s920 = smul.u32 %s18, %s19
      $region52: #{_forward_impl.2} parent=31 // pred_fallthru
        _
    $region32: #{_forward_impl.2} parent=5 // pred_fallthru
      _
    %p921 = scmp.le.s32.totalorder 2, %s9
    // Predicated region
    $region53: #{_forward_impl.2} parent=5 // pred_check
      %p922 = pneg %p921
    $region54: #{_forward_impl.2} parent=5 // pred_check_branch
      %924 = sbr.rel (%p922) target = $region56
    $region55: #{_forward_impl.2} parent=5 // pred_region
      %s925 = ssub.s32 %s9, 2
      // Predicated region
      $region57: #{_forward_impl.2} parent=55 // pred_check
        %p926 = pneg %p130
      $region58: #{_forward_impl.2} parent=55 // pred_check_branch
        %928 = sbr.rel (%p926) target = $region60
      $region59: #{_forward_impl.2} parent=55 // pred_region
        %s929 = smul.u32 %s20, %s21
        %p930 = scmp.lt.s32.totalorder %s929, 0
        %s931 = scalar_select %p930, %s929, 0
        %s932 = scalar_lea.vmem %s3, %s931
      $region60: #{_forward_impl.2} parent=55 // pred_fallthru
        _
    $region56: #{_forward_impl.2} parent=5 // pred_fallthru
      _
  $region6: #{_forward_impl.2} parent=0 // loop_footer
    %s13 = sadd.s32 1, %s9
  $region7: #{_forward_impl.2} parent=0 // loop_footer_branch
    %8 = sbr.rel target = $region3
  $region8: #{_forward_impl.2} parent=0 // loop_exit
    _

</llo_original>
